<compile_context>
chip_gen: v7x
topology: tpu7x:2x2x1
jax: 0.10.0
libtpu: 0.0.40
codegen_flags: <defaults>
</compile_context>

<pallas_src>
import functools

import jax
import jax.numpy as jnp
from jax.experimental import pallas as pl
from jax.experimental.pallas import tpu as pltpu


# --------------------------------------------------------------------------
# VMEM budgeting (generation-aware)
# --------------------------------------------------------------------------
def _vmem_budget():
    """Scoped-VMEM budget: ~50% of physical VMEM (32 MiB on v7x, 64 MiB on
    v5e/v6e), leaving headroom for weights, semaphores and pipeline buffers."""
    try:
        cap = int(pltpu.get_tpu_info().vmem_capacity_bytes)
    except Exception:
        cap = 64 * 1024 * 1024
    return max(16 * 1024 * 1024, cap // 2)


def _largest_row_tile(rows, hw, budget, n_big):
    """Largest row tile (multiple of 8 that divides `rows`, or `rows` itself)
    such that `n_big` double-buffered (t_rows, HW) f32 blocks fit `budget`."""
    per_row = 2 * n_big * hw * 4            # 2 pipeline buffers per big spec
    cap = max(budget // per_row, 1)
    cands = sorted({rows} | {d for d in range(8, rows + 1, 8) if rows % d == 0},
                   reverse=True)
    for t in cands:
        if t <= cap:
            return t
    # TODO(synk): spatially tile HW if even an 8-row full-HW block overflows
    # VMEM (does not occur for realistic SE feature maps).
    return cands[-1]


# --------------------------------------------------------------------------
# Kernels
# --------------------------------------------------------------------------
def fused_se_kernel(x_ref, w1t_ref, b1_ref, w2_ref, b2_ref, o_ref, *, inv_hw):
    """Fused pool + excite + scale for one batch element.

    x_ref  : (C, HW)   per-batch slab (leading batch dim squeezed by BlockSpec)
    w1t_ref: (C, Cr)   Linear(C -> Cr) weight, pre-transposed: contract sublanes
    b1_ref : (1, Cr)
    w2_ref : (C, Cr)   Linear(Cr -> C) weight, native PyTorch layout: contract lanes
    b2_ref : (C, 1)
    o_ref  : (C, HW)
    """
    x = x_ref[...]                                              # (C, HW)
    # Channel means, kept sublane-shaped (no lane relayout).
    pooled = jnp.sum(x, axis=-1, keepdims=True) * inv_hw        # (C, 1)
    # Linear(C -> Cr) + SiLU: contract C along the sublane axis of w1t.
    h = jnp.sum(w1t_ref[...] * pooled, axis=0, keepdims=True) + b1_ref[...]  # (1, Cr)
    h = h * jax.nn.sigmoid(h)                                   # SiLU
    # Linear(Cr -> C) + Sigmoid: contract Cr along the lane axis of w2.
    g = jnp.sum(w2_ref[...] * h, axis=-1, keepdims=True) + b2_ref[...]       # (C, 1)
    s = jax.nn.sigmoid(g)                                       # (C, 1) gate
    o_ref[...] = x * s                                          # broadcast over HW


def pool_rows_kernel(x_ref, sum_ref):
    """Fallback pass 1: row-tiled spatial sums, kept sublane-shaped."""
    sum_ref[...] = jnp.sum(x_ref[...], axis=-1, keepdims=True)  # (t_rows, 1)


def scale_kernel(x_ref, s_ref, o_ref):
    """Fallback pass 2: lane-dense elementwise scale (pure VPU, mem-bound)."""
    o_ref[...] = x_ref[...] * s_ref[...]


# --------------------------------------------------------------------------
# Wrapper
# --------------------------------------------------------------------------
def se_module(x, w1, b1, w2, b2, *, force_two_pass=False):
    """SEModule forward.

    x : (B, C, H, W) float32 (NCHW, as in PyTorch)
    w1: (Cr, C), b1: (Cr,)   -- nn.Linear(C, Cr) weight/bias (PyTorch layout)
    w2: (C, Cr), b2: (C,)    -- nn.Linear(Cr, C) weight/bias (PyTorch layout)
    """
    B, C, H, W = x.shape
    Cr = w1.shape[0]
    HW = H * W
    budget = _vmem_budget()

    x3 = x.reshape(B, C, HW)

    # -------------------- fused single-pass path --------------------------
    weight_bytes = (2 * C * Cr + C + Cr) * 4
    # Per-spec double buffering: x-in and x-out slabs, plus resident weights.
    fused_need = 2 * 2 * C * HW * 4 + 2 * weight_bytes
    if not force_two_pass and fused_need <= budget:
        w1t = w1.T                       # (C, Cr): contraction axis on sublanes
        b1r = b1.reshape(1, Cr)
        b2r = b2.reshape(C, 1)
        out3 = pl.pallas_call(
            functools.partial(fused_se_kernel, inv_hw=1.0 / float(HW)),
            out_shape=jax.ShapeDtypeStruct((B, C, HW), x.dtype),
            grid_spec=pltpu.PrefetchScalarGridSpec(
                num_scalar_prefetch=0,
                grid=(B,),
                in_specs=[
                    pl.BlockSpec((None, C, HW), lambda b: (b, 0, 0)),  # x slab
                    pl.BlockSpec((C, Cr), lambda b: (0, 0)),           # W1^T
                    pl.BlockSpec((1, Cr), lambda b: (0, 0)),           # b1
                    pl.BlockSpec((C, Cr), lambda b: (0, 0)),           # W2
                    pl.BlockSpec((C, 1), lambda b: (0, 0)),            # b2
                ],
                out_specs=pl.BlockSpec((None, C, HW), lambda b: (b, 0, 0)),
            ),
            compiler_params=pltpu.CompilerParams(
                dimension_semantics=("parallel",),   # batches independent
                vmem_limit_bytes=budget,
            ),
        )(x3, w1t, b1r, w2, b2r)
        return out3.reshape(B, C, H, W)

    # -------------------- two-pass fallback (large C*HW slabs) ------------
    rows = B * C
    x2 = x3.reshape(rows, HW)            # fold B*C into the sublane (row) dim

    # Pass 1: row-tiled pooling, full-HW lane-dense blocks, parallel rows.
    t1 = _largest_row_tile(rows, HW, budget, n_big=1)
    sums = pl.pallas_call(
        pool_rows_kernel,
        out_shape=jax.ShapeDtypeStruct((rows, 1), jnp.float32),
        grid_spec=pltpu.PrefetchScalarGridSpec(
            num_scalar_prefetch=0,
            grid=(rows // t1,),
            in_specs=[pl.BlockSpec((t1, HW), lambda r: (r, 0))],
            out_specs=pl.BlockSpec((t1, 1), lambda r: (r, 0)),
        ),
        compiler_params=pltpu.CompilerParams(
            dimension_semantics=("parallel",),
            vmem_limit_bytes=budget,
        ),
    )(x2)

    # Tiny excite MLP on the (B, C) pooled means in plain XLA (MXU matmuls,
    # f32) -- keeps the resident weights out of the pipelined kernels' VMEM.
    pooled = sums.reshape(B, C) * (1.0 / float(HW))
    h = pooled @ w1.T + b1
    h = h * jax.nn.sigmoid(h)                         # SiLU
    gate = jax.nn.sigmoid(h @ w2.T + b2)              # (B, C)
    s2 = gate.reshape(rows, 1).astype(x.dtype)

    # Pass 2: lane-dense elementwise scale, full-HW blocks, parallel rows.
    t2 = _largest_row_tile(rows, HW, budget, n_big=2)
    out2 = pl.pallas_call(
        scale_kernel,
        out_shape=jax.ShapeDtypeStruct((rows, HW), x.dtype),
        grid_spec=pltpu.PrefetchScalarGridSpec(
            num_scalar_prefetch=0,
            grid=(rows // t2,),
            in_specs=[
                pl.BlockSpec((t2, HW), lambda r: (r, 0)),   # x rows
                pl.BlockSpec((t2, 1), lambda r: (r, 0)),    # gate rows
            ],
            out_specs=pl.BlockSpec((t2, HW), lambda r: (r, 0)),
        ),
        compiler_params=pltpu.CompilerParams(
            dimension_semantics=("parallel",),
            vmem_limit_bytes=budget,
        ),
    )(x2, s2)
    return out2.reshape(B, C, H, W)


def reference_se(x, w1, b1, w2, b2):
    """Pure-JAX reference matching the PyTorch forward (PyTorch weight layout)."""
    pooled = jnp.mean(x, axis=(2, 3))                 # (B, C)
    h = pooled @ w1.T + b1                            # (B, Cr)
    h = h * jax.nn.sigmoid(h)                         # SiLU
    s = jax.nn.sigmoid(h @ w2.T + b2)                 # (B, C)
    return x * s[:, :, None, None]


if __name__ == "__main__":
    # Module config: in_channels=4, reduction=2 -> hidden = 2
    B, C, H, W = 2, 4, 16, 16
    reduction = 2
    Cr = int(C // reduction)

    key = jax.random.PRNGKey(0)
    kx, k1, k2, k3, k4 = jax.random.split(key, 5)

    x = jax.random.normal(kx, (B, C, H, W), dtype=jnp.float32)
    # Parameters in native PyTorch nn.Linear layout: weight (out, in), bias (out,).
    w1 = jax.random.normal(k1, (Cr, C), dtype=jnp.float32) * 0.5
    b1 = jax.random.normal(k2, (Cr,), dtype=jnp.float32) * 0.1
    w2 = jax.random.normal(k3, (C, Cr), dtype=jnp.float32) * 0.5
    b2 = jax.random.normal(k4, (C,), dtype=jnp.float32) * 0.1

    ref = reference_se(x, w1, b1, w2, b2)

    # Primary fused path (pool + excite + scale in one pallas_call).
    out = jax.block_until_ready(se_module(x, w1, b1, w2, b2))
    assert out.shape == (B, C, H, W)
    assert jnp.allclose(out, ref, atol=1e-5, rtol=1e-5), "fused path mismatch"

    # Exercise the large-shape fallback (row-tiled pool + XLA MLP + scale) too.
    out_fb = jax.block_until_ready(se_module(x, w1, b1, w2, b2, force_two_pass=True))
    assert jnp.allclose(out_fb, ref, atol=1e-5, rtol=1e-5), "fallback path mismatch"

    print("KERNEL_OK")
</pallas_src>

<mosaic_0001>
module attributes {stable_mosaic.version = 11 : i64} {
  func.func @fused_se_kernel(%arg0: i32, %arg1: memref<1x4x256xf32, #tpu.memory_space<vmem>>, %arg2: memref<4x2xf32, #tpu.memory_space<vmem>>, %arg3: memref<1x2xf32, #tpu.memory_space<vmem>>, %arg4: memref<4x2xf32, #tpu.memory_space<vmem>>, %arg5: memref<4x1xf32, #tpu.memory_space<vmem>>, %arg6: memref<1x4x256xf32, #tpu.memory_space<vmem>>) attributes {dimension_semantics = [#tpu.dimension_semantics<parallel>], iteration_bounds = array<i64: 2>, scalar_prefetch = 0 : i64, scratch_operands = 0 : i64, tpu.core_type = #tpu.core_type<tc>, window_params = [{transform_indices = @transform_0, window_bounds = array<i64: 1, 4, 256>}, {pipeline_mode = #tpu.pipeline_mode<synchronous>, transform_indices = @transform_1, window_bounds = array<i64: 4, 2>}, {pipeline_mode = #tpu.pipeline_mode<synchronous>, transform_indices = @transform_2, window_bounds = array<i64: 1, 2>}, {pipeline_mode = #tpu.pipeline_mode<synchronous>, transform_indices = @transform_3, window_bounds = array<i64: 4, 2>}, {pipeline_mode = #tpu.pipeline_mode<synchronous>, transform_indices = @transform_4, window_bounds = array<i64: 4, 1>}, {transform_indices = @transform_5, window_bounds = array<i64: 1, 4, 256>}]} {
    %c0 = arith.constant 0 : index
    %c0_0 = arith.constant 0 : index
    %c0_1 = arith.constant 0 : index
    %0 = vector.load %arg1[%c0, %c0_0, %c0_1] : memref<1x4x256xf32, #tpu.memory_space<vmem>>, vector<1x4x256xf32>
    %1 = vector.shape_cast %0 : vector<1x4x256xf32> to vector<4x256xf32>
    %cst = arith.constant dense<0.000000e+00> : vector<4xf32>
    %2 = vector.multi_reduction <add>, %1, %cst [1] : vector<4x256xf32> to vector<4xf32>
    %3 = vector.shape_cast %2 : vector<4xf32> to vector<4x1xf32>
    %cst_2 = arith.constant 3.906250e-03 : f32
    %4 = vector.broadcast %cst_2 : f32 to vector<4x1xf32>
    %5 = arith.mulf %3, %4 : vector<4x1xf32>
    %c0_3 = arith.constant 0 : index
    %c0_4 = arith.constant 0 : index
    %6 = vector.load %arg2[%c0_3, %c0_4] : memref<4x2xf32, #tpu.memory_space<vmem>>, vector<4x2xf32>
    %7 = vector.broadcast %5 : vector<4x1xf32> to vector<4x2xf32>
    %8 = arith.mulf %6, %7 : vector<4x2xf32>
    %cst_5 = arith.constant dense<0.000000e+00> : vector<2xf32>
    %9 = vector.multi_reduction <add>, %8, %cst_5 [0] : vector<4x2xf32> to vector<2xf32>
    %10 = vector.shape_cast %9 : vector<2xf32> to vector<1x2xf32>
    %c0_6 = arith.constant 0 : index
    %c0_7 = arith.constant 0 : index
    %11 = vector.load %arg3[%c0_6, %c0_7] : memref<1x2xf32, #tpu.memory_space<vmem>>, vector<1x2xf32>
    %12 = arith.addf %10, %11 : vector<1x2xf32>
    %13 = arith.negf %12 : vector<1x2xf32>
    %14 = math.exp %13 : vector<1x2xf32>
    %cst_8 = arith.constant 1.000000e+00 : f32
    %15 = vector.broadcast %cst_8 : f32 to vector<1x2xf32>
    %16 = arith.addf %15, %14 : vector<1x2xf32>
    %17 = arith.divf %15, %16 : vector<1x2xf32>
    %18 = arith.mulf %12, %17 : vector<1x2xf32>
    %c0_9 = arith.constant 0 : index
    %c0_10 = arith.constant 0 : index
    %19 = vector.load %arg4[%c0_9, %c0_10] : memref<4x2xf32, #tpu.memory_space<vmem>>, vector<4x2xf32>
    %20 = vector.broadcast %18 : vector<1x2xf32> to vector<4x2xf32>
    %21 = arith.mulf %19, %20 : vector<4x2xf32>
    %cst_11 = arith.constant dense<0.000000e+00> : vector<4xf32>
    %22 = vector.multi_reduction <add>, %21, %cst_11 [1] : vector<4x2xf32> to vector<4xf32>
    %23 = vector.shape_cast %22 : vector<4xf32> to vector<4x1xf32>
    %c0_12 = arith.constant 0 : index
    %c0_13 = arith.constant 0 : index
    %24 = vector.load %arg5[%c0_12, %c0_13] : memref<4x1xf32, #tpu.memory_space<vmem>>, vector<4x1xf32>
    %25 = arith.addf %23, %24 : vector<4x1xf32>
    %26 = arith.negf %25 : vector<4x1xf32>
    %27 = math.exp %26 : vector<4x1xf32>
    %cst_14 = arith.constant 1.000000e+00 : f32
    %28 = vector.broadcast %cst_14 : f32 to vector<4x1xf32>
    %29 = arith.addf %28, %27 : vector<4x1xf32>
    %30 = arith.divf %28, %29 : vector<4x1xf32>
    %31 = vector.broadcast %30 : vector<4x1xf32> to vector<4x256xf32>
    %32 = arith.mulf %1, %31 : vector<4x256xf32>
    %c0_15 = arith.constant 0 : index
    %c0_16 = arith.constant 0 : index
    %c0_17 = arith.constant 0 : index
    %33 = vector.load %arg6[%c0_15, %c0_16, %c0_17] : memref<1x4x256xf32, #tpu.memory_space<vmem>>, vector<1x4x256xf32>
    %34 = vector.shape_cast %33 : vector<1x4x256xf32> to vector<4x256xf32>
    %35 = vector.shape_cast %32 : vector<4x256xf32> to vector<1x4x256xf32>
    tpu.vector_store %arg6[%c0_15, %c0_16, %c0_17], %35 {strides = array<i32>} : memref<1x4x256xf32, #tpu.memory_space<vmem>>, vector<1x4x256xf32>,
    return
  }
  func.func @transform_0(%arg0: i32) -> (i32, i32, i32) {
    %c0_i32 = arith.constant 0 : i32
    %c0_i32_0 = arith.constant 0 : i32
    %c0_i32_1 = arith.constant 0 : i32
    return %arg0, %c0_i32, %c0_i32_0 : i32, i32, i32
  }
  func.func @transform_1(%arg0: i32) -> (i32, i32) {
    %c0_i32 = arith.constant 0 : i32
    %c0_i32_0 = arith.constant 0 : i32
    %c0_i32_1 = arith.constant 0 : i32
    return %c0_i32, %c0_i32_0 : i32, i32
  }
  func.func @transform_2(%arg0: i32) -> (i32, i32) {
    %c0_i32 = arith.constant 0 : i32
    %c0_i32_0 = arith.constant 0 : i32
    %c0_i32_1 = arith.constant 0 : i32
    return %c0_i32, %c0_i32_0 : i32, i32
  }
  func.func @transform_3(%arg0: i32) -> (i32, i32) {
    %c0_i32 = arith.constant 0 : i32
    %c0_i32_0 = arith.constant 0 : i32
    %c0_i32_1 = arith.constant 0 : i32
    return %c0_i32, %c0_i32_0 : i32, i32
  }
  func.func @transform_4(%arg0: i32) -> (i32, i32) {
    %c0_i32 = arith.constant 0 : i32
    %c0_i32_0 = arith.constant 0 : i32
    %c0_i32_1 = arith.constant 0 : i32
    return %c0_i32, %c0_i32_0 : i32, i32
  }
  func.func @transform_5(%arg0: i32) -> (i32, i32, i32) {
    %c0_i32 = arith.constant 0 : i32
    %c0_i32_0 = arith.constant 0 : i32
    %c0_i32_1 = arith.constant 0 : i32
    return %arg0, %c0_i32, %c0_i32_0 : i32, i32, i32
  }
}

</mosaic_0001>

<llo_original>
// kernel: tpu_custom_call.1
$region0: #{tpu_custom_call.1}
  #allocation0 [shape = 'u32[]', space=smem, size = 0x4, offset = 0x4, fixed_abs, tag = 'smem constant byte address 0x4 - core index']
  #allocation1 [shape = 'u32[144,128]{1,0:T(1,128)}', space=vmem, size = 0x12000, scoped, tag = 'internal scratch']
  %s0 = inlined_call_operand.vmem [shape: f32[2,4,256], index: 0, kind: input, shape index: {}]
  %s1 = inlined_call_operand.vmem [shape: f32[4,2], index: 1, kind: input, shape index: {}]
  %s2 = inlined_call_operand.vmem [shape: f32[1,2], index: 2, kind: input, shape index: {}]
  %s3 = inlined_call_operand.vmem [shape: f32[4,2], index: 3, kind: input, shape index: {}]
  %s4 = inlined_call_operand.vmem [shape: f32[4,1], index: 4, kind: input, shape index: {}]
  %s5 = inlined_call_operand.hbm [shape: f32[2,4,256], index: 5, kind: output, shape index: {}]
  %s6 = sld [smem:[#allocation0]]
  $region53: #{tpu_custom_call.1} parent=0
    _
  %s8 = ssub.s32 1, %s6
  %s9 = scalar_select 0, %s8, %s6
  $region1: #{tpu_custom_call.1} parent=0
    #allocation2 [shape = 'u8[8192]{0}', space=vmem, size = 0x2000, scoped, tag = 'output window, operand 0']
    #allocation3 [shape = 's32[2]{0}', space=sflag, size = 0x8, scoped, tag = 'scoped memory for tpu_custom_call.1']
    %10 = vsyncpa [#allocation3], 0
    %s11 = scalar_lea.sflag [#allocation3], 1
    %12 = vsyncpa %s11, 0
    loop: start=0, step=1, limit=4
    $region2: #{tpu_custom_call.1} parent=1 // loop_pre_header
      _
    $region3: #{tpu_custom_call.1} parent=1 // loop_header
      %s14 = sphi 0, %s18
      %p15 = scmp.ge.s32.totalorder %s14, 4
      %s24 = sphi 0, %s26
      %s27 = sphi 0, %s24
      %s28 = sphi 0, %s27
      %s44 = sphi 0, %s28
      %s48 = sphi 0, %s48
      %s50 = sphi 0, %s48
      %s51 = sphi 0, %s50
      %s65 = sphi 0, %s51
      %s69 = sphi 0, %s69
      %s71 = sphi 0, %s69
      %s72 = sphi 0, %s71
      %s86 = sphi 0, %s72
      %s90 = sphi 0, %s90
      %s92 = sphi 0, %s90
      %s93 = sphi 0, %s92
      %s107 = sphi 0, %s93
      %s111 = sphi 0, %s111
      %s113 = sphi 0, %s111
      %s114 = sphi 0, %s113
      %s128 = sphi 0, %s114
      %s134 = sphi 0, %s136
      %s137 = sphi 0, %s134
      %s138 = sphi 0, %s137
      %s154 = sphi 0, %s138
    $region4: #{tpu_custom_call.1} parent=1 // loop_header_branch
      %17 = sbr.rel (%p15) target = $region8
    $region5: #{tpu_custom_call.1} parent=1 // loop_body
      %s19 = ssub.s32 %s14, 1
      %s20 = ssub.s32 %s14, 2
      %s21 = sadd.s32 %s14, 1
      %s22 = ssub.s32 %s14, %s21
      %p23 = scmp.eq.s32.totalorder %s22, 0
      %s25 = sadd.s32 %s24, 1
      %s26 = scalar_select %p23, %s24, %s25
      %p29 = pneg %p23
      %p30 = scmp.eq.s32.totalorder %s14, 1
      %p31 = por %p29, %p30
      %p32 = scmp.ne.s32.totalorder %s24, %s27
      %p33 = scmp.eq.s32.totalorder %s14, 0
      %p34 = por %p32, %p33
      %p35 = scmp.ne.s32.totalorder %s24, %s27
      %p36 = scmp.eq.s32.totalorder %s19, 1
      %p37 = por %p35, %p36
      %p38 = scmp.ne.s32.totalorder %s27, %s28
      %p39 = scmp.eq.s32.totalorder %s19, 0
      %p40 = por %p38, %p39
      %p41 = scmp.ne.s32.totalorder %s27, %s28
      %p42 = scmp.eq.s32.totalorder %s20, 1
      %p43 = por %p41, %p42
      %p45 = scmp.ne.s32.totalorder %s28, %s44
      %p46 = scmp.eq.s32.totalorder %s20, 0
      %p47 = por %p45, %p46
      %s49 = sadd.s32 %s48, 1
      %p52 = scmp.eq.s32.totalorder %s14, 1
      %p53 = scmp.ne.s32.totalorder %s48, %s50
      %p54 = scmp.eq.s32.totalorder %s14, 0
      %p55 = por %p53, %p54
      %p56 = scmp.ne.s32.totalorder %s48, %s50
      %p57 = scmp.eq.s32.totalorder %s19, 1
      %p58 = por %p56, %p57
      %p59 = scmp.ne.s32.totalorder %s50, %s51
      %p60 = scmp.eq.s32.totalorder %s19, 0
      %p61 = por %p59, %p60
      %p62 = scmp.ne.s32.totalorder %s50, %s51
      %p63 = scmp.eq.s32.totalorder %s20, 1
      %p64 = por %p62, %p63
      %p66 = scmp.ne.s32.totalorder %s51, %s65
      %p67 = scmp.eq.s32.totalorder %s20, 0
      %p68 = por %p66, %p67
      %s70 = sadd.s32 %s69, 1
      %p73 = scmp.eq.s32.totalorder %s14, 1
      %p74 = scmp.ne.s32.totalorder %s69, %s71
      %p75 = scmp.eq.s32.totalorder %s14, 0
      %p76 = por %p74, %p75
      %p77 = scmp.ne.s32.totalorder %s69, %s71
      %p78 = scmp.eq.s32.totalorder %s19, 1
      %p79 = por %p77, %p78
      %p80 = scmp.ne.s32.totalorder %s71, %s72
      %p81 = scmp.eq.s32.totalorder %s19, 0
      %p82 = por %p80, %p81
      %p83 = scmp.ne.s32.totalorder %s71, %s72
      %p84 = scmp.eq.s32.totalorder %s20, 1
      %p85 = por %p83, %p84
      %p87 = scmp.ne.s32.totalorder %s72, %s86
      %p88 = scmp.eq.s32.totalorder %s20, 0
      %p89 = por %p87, %p88
      %s91 = sadd.s32 %s90, 1
      %p94 = scmp.eq.s32.totalorder %s14, 1
      %p95 = scmp.ne.s32.totalorder %s90, %s92
      %p96 = scmp.eq.s32.totalorder %s14, 0
      %p97 = por %p95, %p96
      %p98 = scmp.ne.s32.totalorder %s90, %s92
      %p99 = scmp.eq.s32.totalorder %s19, 1
      %p100 = por %p98, %p99
      %p101 = scmp.ne.s32.totalorder %s92, %s93
      %p102 = scmp.eq.s32.totalorder %s19, 0
      %p103 = por %p101, %p102
      %p104 = scmp.ne.s32.totalorder %s92, %s93
      %p105 = scmp.eq.s32.totalorder %s20, 1
      %p106 = por %p104, %p105
      %p108 = scmp.ne.s32.totalorder %s93, %s107
      %p109 = scmp.eq.s32.totalorder %s20, 0
      %p110 = por %p108, %p109
      %s112 = sadd.s32 %s111, 1
      %p115 = scmp.eq.s32.totalorder %s14, 1
      %p116 = scmp.ne.s32.totalorder %s111, %s113
      %p117 = scmp.eq.s32.totalorder %s14, 0
      %p118 = por %p116, %p117
      %p119 = scmp.ne.s32.totalorder %s111, %s113
      %p120 = scmp.eq.s32.totalorder %s19, 1
      %p121 = por %p119, %p120
      %p122 = scmp.ne.s32.totalorder %s113, %s114
      %p123 = scmp.eq.s32.totalorder %s19, 0
      %p124 = por %p122, %p123
      %p125 = scmp.ne.s32.totalorder %s113, %s114
      %p126 = scmp.eq.s32.totalorder %s20, 1
      %p127 = por %p125, %p126
      %p129 = scmp.ne.s32.totalorder %s114, %s128
      %p130 = scmp.eq.s32.totalorder %s20, 0
      %p131 = por %p129, %p130
      %s132 = ssub.s32 %s14, %s21
      %p133 = scmp.eq.s32.totalorder %s132, 0
      %s135 = sadd.s32 %s134, 1
      %s136 = scalar_select %p133, %s134, %s135
      %p139 = pneg %p133
      %p140 = scmp.eq.s32.totalorder %s14, 1
      %p141 = por %p139, %p140
      %p142 = scmp.ne.s32.totalorder %s134, %s137
      %p143 = scmp.eq.s32.totalorder %s14, 0
      %p144 = por %p142, %p143
      %p145 = scmp.ne.s32.totalorder %s134, %s137
      %p146 = scmp.eq.s32.totalorder %s19, 1
      %p147 = por %p145, %p146
      %p148 = scmp.ne.s32.totalorder %s137, %s138
      %p149 = scmp.eq.s32.totalorder %s19, 0
      %p150 = por %p148, %p149
      %p151 = scmp.ne.s32.totalorder %s137, %s138
      %p152 = scmp.eq.s32.totalorder %s20, 1
      %p153 = por %p151, %p152
      %p155 = scmp.ne.s32.totalorder %s138, %s154
      %p156 = scmp.eq.s32.totalorder %s20, 0
      %p157 = por %p155, %p156
      %p158 = scmp.le.s32.totalorder 1, %s14
      %p159 = scmp.lt.s32.totalorder %s14, 3
      %p160 = pnand %p158, %p159
      %p161 = pneg %p160
      // Predicated region
      $region9: #{tpu_custom_call.1} parent=5 // pred_check
        _
      $region10: #{tpu_custom_call.1} parent=5 // pred_check_branch
        %163 = sbr.rel (%p160) target = $region12
      $region11: #{tpu_custom_call.1} parent=5 // pred_region
        %s164 = ssub.s32 %s14, 1
        // Predicated region
        $region13: #{tpu_custom_call.1} parent=11 // pred_check
          %p165 = pneg %p61
        $region14: #{tpu_custom_call.1} parent=11 // pred_check_branch
          %167 = sbr.rel (%p165) target = $region16
        $region15: #{tpu_custom_call.1} parent=11 // pred_region
          _
        $region16: #{tpu_custom_call.1} parent=11 // pred_fallthru
          _
        // Predicated region
        $region17: #{tpu_custom_call.1} parent=11 // pred_check
          %p168 = pneg %p82
        $region18: #{tpu_custom_call.1} parent=11 // pred_check_branch
          %170 = sbr.rel (%p168) target = $region20
        $region19: #{tpu_custom_call.1} parent=11 // pred_region
          _
        $region20: #{tpu_custom_call.1} parent=11 // pred_fallthru
          _
        // Predicated region
        $region21: #{tpu_custom_call.1} parent=11 // pred_check
          %p171 = pneg %p103
        $region22: #{tpu_custom_call.1} parent=11 // pred_check_branch
          %173 = sbr.rel (%p171) target = $region24
        $region23: #{tpu_custom_call.1} parent=11 // pred_region
          _
        $region24: #{tpu_custom_call.1} parent=11 // pred_fallthru
          _
        // Predicated region
        $region25: #{tpu_custom_call.1} parent=11 // pred_check
          %p174 = pneg %p124
        $region26: #{tpu_custom_call.1} parent=11 // pred_check_branch
          %176 = sbr.rel (%p174) target = $region28
        $region27: #{tpu_custom_call.1} parent=11 // pred_region
          _
        $region28: #{tpu_custom_call.1} parent=11 // pred_fallthru
          _
      $region12: #{tpu_custom_call.1} parent=5 // pred_fallthru
        _
      %p177 = scmp.lt.s32.totalorder %s14, 2
      // Predicated region
      $region29: #{tpu_custom_call.1} parent=5 // pred_check
        %p178 = pneg %p177
      $region30: #{tpu_custom_call.1} parent=5 // pred_check_branch
        %180 = sbr.rel (%p178) target = $region32
      $region31: #{tpu_custom_call.1} parent=5 // pred_region
        // Predicated region
        $region33: #{tpu_custom_call.1} parent=31 // pred_check
          %p181 = pneg %p34
        $region34: #{tpu_custom_call.1} parent=31 // pred_check_branch
          %183 = sbr.rel (%p181) target = $region36
        $region35: #{tpu_custom_call.1} parent=31 // pred_region
          %p184 = scmp.lt.s32.totalorder %s14, 1
          %s185 = scalar_select %p184, %s14, 1
          %s186 = smul.addr %s185, 2
          %s187 = smul.addr %s186, 4
          %s188 = scalar_lea.vmem %s0, %s187
        $region36: #{tpu_custom_call.1} parent=31 // pred_fallthru
          _
      $region32: #{tpu_custom_call.1} parent=5 // pred_fallthru
        _
      %p189 = scmp.le.s32.totalorder 1, %s14
      %p190 = scmp.lt.s32.totalorder %s14, 3
      %p191 = pnand %p189, %p190
      %p192 = pneg %p191
      // Predicated region
      $region37: #{tpu_custom_call.1} parent=5 // pred_check
        _
      $region38: #{tpu_custom_call.1} parent=5 // pred_check_branch
        %194 = sbr.rel (%p191) target = $region40
      $region39: #{tpu_custom_call.1} parent=5 // pred_region
        %s195 = ssub.s32 %s14, 1
        %p196 = scmp.lt.s32.totalorder %s19, 1
        %s197 = scalar_select %p196, %s19, 1
        %s198 = smul.addr %s197, 2
        %s199 = smul.addr %s198, 4
        %s200 = scalar_lea.vmem %s0, %s199
        %p201 = pneg %p40
        %p202 = pneg %p37
        %p203 = pneg %p61
        %p204 = pneg %p58
        %p205 = pneg %p82
        %p206 = pneg %p79
        %p207 = pneg %p103
        %p208 = pneg %p100
        %p209 = pneg %p124
        %p210 = pneg %p121
        %p211 = pneg %p150
        %p212 = pneg %p147
        %s213 = sand.u32 %s137, 1
        %s214 = scalar_lea.sflag [#allocation3], %s213
        %s215 = sand.u32 %s137, 1
        %s216 = smul.addr %s215, 8
        %s217 = scalar_lea.vmem [#allocation2], %s216
        %p218 = scmp.lt.s32.totalorder %s19, 1
        %s219 = scalar_select %p218, %s19, 1
        %s220 = smul.addr %s219, 2
        %s221 = smul.addr %s220, 4
        %s222 = scalar_lea.vmem %s0, %s221
        %v223 = vld [vmem:[%s222] sm:$0xff]
        %v225 = vcombine.high %v223, %v223
        %vm227 = vcmask 1043456
        %v228 = vsel %vm227, %v223, 0.0
        %v229 = vsel %vm227, %v225, 0.0
        %v230 = vadd.f32 %v228, %v229
        %231 = vadd.xlane.f32.xlu0 %v230
        %v232 = vpop.xlane.xlu0 %231
        %v233 = vmul.f32 %v232, 0.00390625
        %v234 = vld [vmem:[%s1] sm:$0xf]
        %v235 = vmul.f32 %v234, %v233
        %vm236 = vcmask 11264
        %v237 = vsel %vm236, %v235, 0.0
        %v238 = vrot.slane %v237, 4
        %v239 = vadd.f32 %v237, %v238
        %v240 = vrot.slane %v239, 2
        %v241 = vadd.f32 %v239, %v240
        %v242 = vrot.slane %v241, 1
        %v243 = vadd.f32 %v241, %v242
        %v244 = vld [vmem:[%s2] sm:$0x1]
        %v245 = vadd.f32 %v243, %v244
        %v246 = vxor.u32 %v245, 2147483648
        %v247 = vmul.f32 %v246, 1.442695
        %v248 = vpow.pop %v247
        %v249 = vadd.f32 %v248, 1.0
        %v250 = vrcp.pop %v249
        %v251 = vmul.f32 1.0, %v250
        %v252 = vmul.f32 %v245, %v251
        %v253 = vld [vmem:[%s3] sm:$0xf]
        %v254 = vlaneseq
        %v255 = vshrl.u32 %v254, 7
        %v256 = vsub.s32 0, %v255
        %v257 = vrot.slane %v252, %v256
        %v258 = vmul.f32 %v253, %v257
        %v259 = vsel %vm236, %v258, 0.0
        %260 = vadd.xlane.f32.xlu0 %v259
        %v261 = vpop.xlane.xlu0 %260
        %v262 = vld [vmem:[%s4] sm:$0xf]
        %v263 = vadd.f32 %v261, %v262
        %v264 = vxor.u32 %v263, 2147483648
        %v265 = vmul.f32 %v264, 1.442695
        %v266 = vpow.pop %v265
        %v267 = vadd.f32 %v266, 1.0
        %v268 = vrcp.pop %v267
        %v269 = vmul.f32 1.0, %v268
        %271 = vset.pattern.permute.xlu0 0
        %272 = vperm.xlu0 %271, %v269
        %v273 = vpop.permute.xlu0 %272
        %v275 = vunpack.c.l.s4 839922192
        %v276 = vunpack.c.0.s8 %v275
        %v277 = vlaneseq
        %v278 = vshrl.u32 %v277, 7
        %v279 = vsub.s32 %v276, %v278
        %v280 = vrot.slane %v273, %v279
        %v282 = vmul.f32 %v223, %v280
        %283 = vst [vmem:[%s217] sm:$0xff] %v282
        %s284 = sand.u32 %s137, 1
        %s285 = scalar_lea.sflag [#allocation3], %s284
        %s286 = sand.u32 %s137, 1
        %s287 = smul.addr %s286, 8
        %s288 = scalar_lea.vmem [#allocation2], %s287
        // Predicated region
        $region41: #{tpu_custom_call.1} parent=39 // pred_check
          %p289 = pneg %p147
        $region42: #{tpu_custom_call.1} parent=39 // pred_check_branch
          %291 = sbr.rel (%p289) target = $region44
        $region43: #{tpu_custom_call.1} parent=39 // pred_region
          %s293 = ssub.s32 128, 128
          %294 = vsyncadd %s285, %s293
          %s295 = smul.addr %s19, 2
          %s296 = smul.addr %s295, 64
          %s297 = scalar_lea.hbm %s5, %s296
          %s299 = sshll.u32 %s288, 4
          %s300 = int_to_ptr.vmem [resolvable:$true] %s299
          %302 = dma.vmem_to_hbm [thread:$0]  %s300, 128, %s297, %s285
        $region44: #{tpu_custom_call.1} parent=39 // pred_fallthru
          _
      $region40: #{tpu_custom_call.1} parent=5 // pred_fallthru
        _
      %p303 = scmp.le.s32.totalorder 2, %s14
      // Predicated region
      $region45: #{tpu_custom_call.1} parent=5 // pred_check
        %p304 = pneg %p303
      $region46: #{tpu_custom_call.1} parent=5 // pred_check_branch
        %306 = sbr.rel (%p304) target = $region48
      $region47: #{tpu_custom_call.1} parent=5 // pred_region
        %s307 = ssub.s32 %s14, 2
        // Predicated region
        $region49: #{tpu_custom_call.1} parent=47 // pred_check
          %p308 = pneg %p153
        $region50: #{tpu_custom_call.1} parent=47 // pred_check_branch
          %310 = sbr.rel (%p308) target = $region52
        $region51: #{tpu_custom_call.1} parent=47 // pred_region
          %s311 = sand.u32 %s138, 1
          %s312 = scalar_lea.sflag [#allocation3], %s311
          %s313 = sand.u32 %s138, 1
          %s314 = smul.addr %s313, 8
          %s315 = scalar_lea.vmem [#allocation2], %s314
          %316 = dma.done %s312, 128
        $region52: #{tpu_custom_call.1} parent=47 // pred_fallthru
          _
      $region48: #{tpu_custom_call.1} parent=5 // pred_fallthru
        _
    $region6: #{tpu_custom_call.1} parent=1 // loop_footer
      %s18 = sadd.s32 1, %s14
    $region7: #{tpu_custom_call.1} parent=1 // loop_footer_branch
      %13 = sbr.rel target = $region3
    $region8: #{tpu_custom_call.1} parent=1 // loop_exit
      _
    %317 = vsyncpa [#allocation3], 1
    %s318 = scalar_lea.sflag [#allocation3], 1
    %319 = vsyncpa %s318, 1

</llo_original>
